<compile_context>
chip_gen: v6e
topology: v6e:2x2x1
jax: 0.10.0
libtpu: 0.0.40
codegen_flags: <defaults>
</compile_context>

<pallas_src>
import math

import jax
import jax.numpy as jnp
from jax.experimental import pallas as pl
from jax.experimental.pallas import tpu as pltpu


def _round_up(a, b):
    return ((a + b - 1) // b) * b


def _lcm(a, b):
    return a * b // math.gcd(a, b)


def embedding_kernel(x_ref, w_ref, pb_ref, o_ref):
    # x_ref  : (TM, Kp)  streamed row tile of the packed input (Kp = P*F, full dim)
    # w_ref  : (Kp, Dp)  block-diagonal weight, resident across the grid
    # pb_ref : (TM, Dp)  fused bias + positional-encoding block, resident (read once)
    # o_ref  : (TM, Dp)  lane-dense output tile (bit-identical to row-major (M, D))
    o_ref[...] = (
        jnp.dot(x_ref[...], w_ref[...], preferred_element_type=jnp.float32)
        + pb_ref[...]
    ).astype(o_ref.dtype)
    # TODO(synk): nn.Dropout(0.1) is identity in eval mode; training-mode dropout
    # (pltpu.prng_seed / prng_random_bits + mask/scale) not implemented.


def embedding_forward(x, w, b, pos_enc, *, tm=512):
    """x: (B, S, F) f32, w: (F, D) f32 (PyTorch weight.T), b: (1, D) f32,
    pos_enc: (S, D) f32.  Returns (B, S, D) f32 = dropout-eval(x @ w + b + pos)."""
    B, S, F = x.shape
    D = w.shape[1]
    M = B * S

    # --- row-packing factor -------------------------------------------------
    # Pack P logical rows per lane row so P*D is a multiple of 128 (lane-dense,
    # unpadded output).  Requires M % P == 0 and S % P == 0 (batch / positional
    # period alignment); otherwise fall back to lane padding + a final slice.
    P = 128 // math.gcd(D, 128)
    if (M % P) or (S % P):
        P = 1                      # fallback path (correct, but pads/slices lanes)
    Kp = P * F                     # packed contraction depth (deliberately NOT padded)
    Dpack = P * D                  # packed row width
    Dp = _round_up(Dpack, 128)     # == Dpack on the packed path
    Mp = M // P                    # packed rows
    Sp = S // P                    # positional period measured in packed rows

    # --- row tile (multiple of 8 sublanes and of Sp; >=2 grid steps when possible)
    if Mp <= 8:
        TM = Mp                    # single tile; "block == full array dim" exception
    else:
        align = _lcm(8, Sp)
        TM = min(_round_up(tm, align), _round_up(pl.cdiv(Mp, 2), align))
    grid = (pl.cdiv(Mp, TM),)

    # --- host-side constants (tiny, built once; no (M, D)-sized materialization)
    # Block-diagonal weight (Kp, Dp): W repeated P times on the diagonal.
    w_bd = jnp.einsum("pq,fd->pfqd", jnp.eye(P, dtype=w.dtype), w).reshape(Kp, Dpack)
    # Fused bias + positional table, packed: row r holds positions r*P .. r*P+P-1.
    pb = (pos_enc + b).astype(jnp.float32).reshape(Sp, Dpack)
    if Dp != Dpack:                # fallback path only
        w_bd = jnp.pad(w_bd, ((0, 0), (0, Dp - Dpack)))
        pb = jnp.pad(pb, ((0, 0), (0, Dp - Dpack)))
    # Tile the tiny pos+bias table to exactly one TM-row block (resident: constant
    # index_map => DMA'd once for the whole grid, negligible traffic).
    pb_tile = jnp.tile(pb, (TM // Sp, 1))                      # (TM, Dp)

    # Input: pure row-major reshape — no pad, no extra HBM pass over x.
    x2 = x.reshape(Mp, Kp)

    # --- VMEM budget (double-buffered streamed tiles + resident constants) ---
    vmem_need = 4 * (2 * TM * Kp + 2 * Kp * Dp + 2 * TM * Dp + 2 * TM * Dp)
    vmem_limit = min(64 * 1024 * 1024, max(vmem_need + (4 << 20), 32 * 1024 * 1024))

    out = pl.pallas_call(
        embedding_kernel,
        out_shape=jax.ShapeDtypeStruct((Mp, Dp), jnp.float32),
        grid=grid,
        in_specs=[
            pl.BlockSpec((TM, Kp), lambda i: (i, 0)),   # streamed input row tiles
            pl.BlockSpec((Kp, Dp), lambda i: (0, 0)),   # resident weight
            pl.BlockSpec((TM, Dp), lambda i: (0, 0)),   # resident bias + positional
        ],
        out_specs=pl.BlockSpec((TM, Dp), lambda i: (i, 0)),
        compiler_params=pltpu.CompilerParams(
            dimension_semantics=("parallel",),
            vmem_limit_bytes=vmem_limit,
        ),
        cost_estimate=pl.CostEstimate(
            flops=2 * Mp * Kp * Dp,
            transcendentals=0,
            bytes_accessed=4 * (Mp * Kp + Kp * Dp + TM * Dp + Mp * Dp),
        ),
    )(x2, w_bd, pb_tile)

    if Dp == Dpack:
        # Packed path: (Mp, P*D) is bit-identical to row-major (M, D) — no slice.
        return out.reshape(B, S, D)
    return out[:, :D].reshape(B, S, D)          # fallback path only


def create_positional_encoding(max_len, embedding_dim):
    """Same math as the PyTorch create_positional_encoding (kept (max_len, D);
    the leading broadcast dim is added in the wrapper/reference instead)."""
    assert embedding_dim % 2 == 0, "embedding_dim must be even for sin/cos PE"
    position = jnp.arange(0, max_len, dtype=jnp.float32)[:, None]            # (L, 1)
    div_term = jnp.exp(jnp.arange(0, embedding_dim, 2, dtype=jnp.float32)
                       * (-math.log(10000.0) / embedding_dim))               # (D/2,)
    pe = jnp.zeros((max_len, embedding_dim), dtype=jnp.float32)
    pe = pe.at[:, 0::2].set(jnp.sin(position * div_term))
    pe = pe.at[:, 1::2].set(jnp.cos(position * div_term))
    return pe


if __name__ == "__main__":
    # Small shapes implied by the module: encoder path, Linear(features_num -> embedding_dim)
    B, S, F, D = 2, 8, 6, 32
    max_len = 512

    key = jax.random.PRNGKey(0)
    kx, kw, kb = jax.random.split(key, 3)

    x = jax.random.normal(kx, (B, S, F), dtype=jnp.float32)

    # Deterministic nn.Linear-style init: U(-1/sqrt(F), 1/sqrt(F))
    bound = 1.0 / math.sqrt(F)
    w = jax.random.uniform(kw, (F, D), minval=-bound, maxval=bound,
                           dtype=jnp.float32)           # = PyTorch weight.T
    b = jax.random.uniform(kb, (1, D), minval=-bound, maxval=bound,
                           dtype=jnp.float32)

    pos_full = create_positional_encoding(max_len, D)   # (max_len, D)
    pos_enc = pos_full[:S]                               # (S, D): the [:, :seq_len, :] slice

    out = embedding_forward(x, w, b, pos_enc)
    out = jax.block_until_ready(out)

    # Reference check in plain JAX (dropout is identity in eval mode).
    ref = x @ w + b[None] + pos_enc[None]
    assert out.shape == (B, S, D)
    assert jnp.allclose(out, ref, atol=1e-5, rtol=1e-5)

    print("KERNEL_OK")
</pallas_src>

<mosaic_0001>
module attributes {stable_mosaic.version = 11 : i64} {
  func.func @embedding_kernel(%arg0: i32, %arg1: memref<4x24xf32, #tpu.memory_space<vmem>>, %arg2: memref<24x128xf32, #tpu.memory_space<vmem>>, %arg3: memref<4x128xf32, #tpu.memory_space<vmem>>, %arg4: memref<4x128xf32, #tpu.memory_space<vmem>>) attributes {dimension_semantics = [#tpu.dimension_semantics<parallel>], iteration_bounds = array<i64: 1>, scalar_prefetch = 0 : i64, scratch_operands = 0 : i64, tpu.core_type = #tpu.core_type<tc>, window_params = [{transform_indices = @transform_0, window_bounds = array<i64: 4, 24>}, {pipeline_mode = #tpu.pipeline_mode<synchronous>, transform_indices = @transform_1, window_bounds = array<i64: 24, 128>}, {pipeline_mode = #tpu.pipeline_mode<synchronous>, transform_indices = @transform_2, window_bounds = array<i64: 4, 128>}, {transform_indices = @transform_3, window_bounds = array<i64: 4, 128>}]} {
    %c0 = arith.constant 0 : index
    %c0_0 = arith.constant 0 : index
    %0 = vector.load %arg1[%c0, %c0_0] : memref<4x24xf32, #tpu.memory_space<vmem>>, vector<4x24xf32>
    %c0_1 = arith.constant 0 : index
    %c0_2 = arith.constant 0 : index
    %1 = vector.load %arg2[%c0_1, %c0_2] : memref<24x128xf32, #tpu.memory_space<vmem>>, vector<24x128xf32>
    %cst = arith.constant dense<0.000000e+00> : vector<4x128xf32>
    %2 = tpu.matmul %0, %1, %cst {dimension_numbers = #tpu.dot_dimension_numbers<[1], [0], [0], [1], [0, 0, 1, 1], [], []>} : vector<4x24xf32>, vector<24x128xf32>, vector<4x128xf32> -> vector<4x128xf32>
    %c0_3 = arith.constant 0 : index
    %c0_4 = arith.constant 0 : index
    %3 = vector.load %arg3[%c0_3, %c0_4] : memref<4x128xf32, #tpu.memory_space<vmem>>, vector<4x128xf32>
    %4 = arith.addf %2, %3 : vector<4x128xf32>
    %c0_5 = arith.constant 0 : index
    %c0_6 = arith.constant 0 : index
    %5 = vector.load %arg4[%c0_5, %c0_6] : memref<4x128xf32, #tpu.memory_space<vmem>>, vector<4x128xf32>
    tpu.vector_store %arg4[%c0_5, %c0_6], %4 {strides = array<i32>} : memref<4x128xf32, #tpu.memory_space<vmem>>, vector<4x128xf32>,
    return
  }
  func.func @transform_0(%arg0: i32) -> (i32, i32) {
    %c0_i32 = arith.constant 0 : i32
    %c0_i32_0 = arith.constant 0 : i32
    return %arg0, %c0_i32 : i32, i32
  }
  func.func @transform_1(%arg0: i32) -> (i32, i32) {
    %c0_i32 = arith.constant 0 : i32
    %c0_i32_0 = arith.constant 0 : i32
    %c0_i32_1 = arith.constant 0 : i32
    return %c0_i32, %c0_i32_0 : i32, i32
  }
  func.func @transform_2(%arg0: i32) -> (i32, i32) {
    %c0_i32 = arith.constant 0 : i32
    %c0_i32_0 = arith.constant 0 : i32
    %c0_i32_1 = arith.constant 0 : i32
    return %c0_i32, %c0_i32_0 : i32, i32
  }
  func.func @transform_3(%arg0: i32) -> (i32, i32) {
    %c0_i32 = arith.constant 0 : i32
    %c0_i32_0 = arith.constant 0 : i32
    return %arg0, %c0_i32 : i32, i32
  }
}

</mosaic_0001>

<llo_original>
// kernel: tpu_custom_call.1
$region0: #{tpu_custom_call.1}
  #allocation0 [shape = 'u32[]', space=smem, size = 0x4, offset = 0x4, fixed_abs, tag = 'smem constant byte address 0x4 - core index']
  #allocation1 [shape = 'u32[144,128]{1,0:T(1,128)}', space=vmem, size = 0x12000, scoped, tag = 'internal scratch']
  %s0 = inlined_call_operand.hbm [shape: f32[4,24], index: 0, kind: input, shape index: {}]
  %s1 = inlined_call_operand.hbm [shape: f32[24,128], index: 1, kind: input, shape index: {}]
  %s2 = inlined_call_operand.hbm [shape: f32[4,128], index: 2, kind: input, shape index: {}]
  %s3 = inlined_call_operand.hbm [shape: f32[4,128], index: 3, kind: output, shape index: {}]
  %s4 = sld [smem:[#allocation0]]
  $region34: #{tpu_custom_call.1} parent=0
    _
  %s6 = ssub.s32 1, %s4
  %s7 = scalar_select 0, %s6, %s4
  $region1: #{tpu_custom_call.1} parent=0
    #allocation2 [shape = 'u8[2048]{0}', space=vmem, size = 0x800, scoped, tag = 'input window, operand 0, single buffered']
    #allocation3 [shape = 's32[1]{0}', space=sflag, size = 0x4, scoped, tag = 'scoped memory for tpu_custom_call.1']
    #allocation4 [shape = 's32[1]{0}', space=sflag, size = 0x4, scoped, tag = 'scoped memory for tpu_custom_call.1']
    #allocation5 [shape = 'u8[12288]{0}', space=vmem, size = 0x3000, scoped, tag = 'input window, operand 1, single buffered']
    #allocation6 [shape = 's32[1]{0}', space=sflag, size = 0x4, scoped, tag = 'scoped memory for tpu_custom_call.1']
    #allocation7 [shape = 'u8[2048]{0}', space=vmem, size = 0x800, scoped, tag = 'input window, operand 2, single buffered']
    #allocation8 [shape = 'u8[2048]{0}', space=vmem, size = 0x800, scoped, tag = 'output window, operand 0, single buffered']
    %8 = vsyncpa [#allocation3], 0
    %9 = vsyncpa [#allocation6], 0
    %10 = vsyncpa [#allocation4], 0
    // Predicated region
    $region2: #{tpu_custom_call.1} parent=1 // pred_check
      _
    $region3: #{tpu_custom_call.1} parent=1 // pred_check_branch
      %12 = sbr.rel (0) target = $region5
    $region4: #{tpu_custom_call.1} parent=1 // pred_region
      %s14 = ssub.s32 64, 64
      %15 = vsyncadd [#allocation3], %s14
      %s17 = sshll.u32 [#allocation2], 4
      %s18 = int_to_ptr.vmem [resolvable:$true] %s17
      %20 = dma.hbm_to_vmem [thread:$0]  %s0, 64, %s18, [#allocation3]
    $region5: #{tpu_custom_call.1} parent=1 // pred_fallthru
      _
    // Predicated region
    $region6: #{tpu_custom_call.1} parent=1 // pred_check
      _
    $region7: #{tpu_custom_call.1} parent=1 // pred_check_branch
      %22 = sbr.rel (0) target = $region9
    $region8: #{tpu_custom_call.1} parent=1 // pred_region
      %s24 = ssub.s32 384, 384
      %25 = vsyncadd [#allocation6], %s24
      %s26 = sshll.u32 [#allocation5], 4
      %s27 = int_to_ptr.vmem [resolvable:$true] %s26
      %32 = dma.hbm_to_vmem [thread:$0]  %s1, 384, %s27, [#allocation6], 128, 128, 8
    $region9: #{tpu_custom_call.1} parent=1 // pred_fallthru
      _
    // Predicated region
    $region10: #{tpu_custom_call.1} parent=1 // pred_check
      _
    $region11: #{tpu_custom_call.1} parent=1 // pred_check_branch
      %34 = sbr.rel (0) target = $region13
    $region12: #{tpu_custom_call.1} parent=1 // pred_region
      %s36 = ssub.s32 64, 64
      %37 = vsyncadd [#allocation6], %s36
      %s39 = sshll.u32 [#allocation7], 4
      %s40 = int_to_ptr.vmem [resolvable:$true] %s39
      %42 = dma.hbm_to_vmem [thread:$0]  %s2, 64, %s40, [#allocation6]
    $region13: #{tpu_custom_call.1} parent=1 // pred_fallthru
      _
    // Predicated region
    $region14: #{tpu_custom_call.1} parent=1 // pred_check
      _
    $region15: #{tpu_custom_call.1} parent=1 // pred_check_branch
      %44 = sbr.rel (0) target = $region17
    $region16: #{tpu_custom_call.1} parent=1 // pred_region
      %45 = dma.done [#allocation3], 64
    $region17: #{tpu_custom_call.1} parent=1 // pred_fallthru
      _
    // Predicated region
    $region18: #{tpu_custom_call.1} parent=1 // pred_check
      _
    $region19: #{tpu_custom_call.1} parent=1 // pred_check_branch
      %47 = sbr.rel (0) target = $region21
    $region20: #{tpu_custom_call.1} parent=1 // pred_region
      %48 = dma.done [#allocation6], 384
    $region21: #{tpu_custom_call.1} parent=1 // pred_fallthru
      _
    // Predicated region
    $region22: #{tpu_custom_call.1} parent=1 // pred_check
      _
    $region23: #{tpu_custom_call.1} parent=1 // pred_check_branch
      %50 = sbr.rel (0) target = $region25
    $region24: #{tpu_custom_call.1} parent=1 // pred_region
      %51 = dma.done [#allocation6], 64
    $region25: #{tpu_custom_call.1} parent=1 // pred_fallthru
      _
    %v52 = vld [vmem:[#allocation2] sm:$0xf]
    %v53 = vld [vmem:[#allocation5] sm:$0xff]
    %v54 = vld [vmem:[#allocation5 + $0x8] sm:$0xff]
    %v55 = vld [vmem:[#allocation5 + $0x10] sm:$0xff]
    %v56 = vld [vmem:[#allocation7] sm:$0xf]
    %vm57 = vcmask 195584
    %v59 = vsel %vm57, %v52, 0
    %61 = vmatprep.subr.mxu0 0.0
    %62 = vmatpush1.msra.mxu0 0.0
    %63 = vmatprep.subr.mxu0 0.0
    %64 = vmatpush1.msra.mxu0 0.0
    %65 = vmatprep.subr.mxu0 0.0
    %66 = vmatpush1.msra.mxu0 0.0
    %67 = vmatprep.subr.mxu0 0.0
    %68 = vmatpush1.msra.mxu0 0.0
    %69 = vmatprep.subr.mxu0 0.0
    %70 = vmatpush1.msra.mxu0 0.0
    %71 = vmatprep.subr.mxu0 0.0
    %72 = vmatpush1.msra.mxu0 0.0
    %73 = vmatprep.subr.mxu0 0.0
    %74 = vmatpush1.msra.mxu0 0.0
    %75 = vmatprep.subr.mxu0 0.0
    %76 = vmatpush1.msra.mxu0 0.0
    %77 = vmatprep.subr.mxu0 0.0
    %78 = vmatpush1.msra.mxu0 0.0
    %79 = vmatprep.subr.mxu0 0.0
    %80 = vmatpush1.msra.mxu0 0.0
    %81 = vmatprep.subr.mxu0 0.0
    %82 = vmatpush1.msra.mxu0 0.0
    %83 = vmatprep.subr.mxu0 0.0
    %84 = vmatpush1.msra.mxu0 0.0
    %85 = vmatprep.subr.mxu0 0.0
    %86 = vmatpush1.msra.mxu0 0.0
    %87 = vmatprep.subr.mxu0 0.0
    %88 = vmatpush1.msra.mxu0 %v55
    %89 = vmatprep.subr.mxu0 0.0
    %90 = vmatpush1.msra.mxu0 %v54
    %91 = vmatprep.subr.mxu0 0.0
    %92 = vmatpush1.msra.mxu0 %v53
    %93 = vmatprep.subr.mxu0 0.0
    %94 = vmatpush2.msra.mxu0 0.0
    %95 = vmatprep.subr.mxu0 0.0
    %96 = vmatpush2.msra.mxu0 0.0
    %97 = vmatprep.subr.mxu0 0.0
    %98 = vmatpush2.msra.mxu0 0.0
    %99 = vmatprep.subr.mxu0 0.0
    %100 = vmatpush2.msra.mxu0 0.0
    %101 = vmatprep.subr.mxu0 0.0
    %102 = vmatpush2.msra.mxu0 0.0
    %103 = vmatprep.subr.mxu0 0.0
    %104 = vmatpush2.msra.mxu0 0.0
    %105 = vmatprep.subr.mxu0 0.0
    %106 = vmatpush2.msra.mxu0 0.0
    %107 = vmatprep.subr.mxu0 0.0
    %108 = vmatpush2.msra.mxu0 0.0
    %109 = vmatprep.subr.mxu0 0.0
    %110 = vmatpush2.msra.mxu0 0.0
    %111 = vmatprep.subr.mxu0 0.0
    %112 = vmatpush2.msra.mxu0 0.0
    %113 = vmatprep.subr.mxu0 0.0
    %114 = vmatpush2.msra.mxu0 0.0
    %115 = vmatprep.subr.mxu0 0.0
    %116 = vmatpush2.msra.mxu0 0.0
    %117 = vmatprep.subr.mxu0 0.0
    %118 = vmatpush2.msra.mxu0 0.0
    %119 = vmatprep.subr.mxu0 0.0
    %120 = vmatpush2.msra.mxu0 0.0
    %121 = vmatprep.subr.mxu0 0.0
    %122 = vmatpush2.msra.mxu0 0.0
    %123 = vmatprep.subr.mxu0 0.0
    %124 = vmatpush2.msra.mxu0 0.0
    %125 = vmatprep.mubr.f32.mxu0 0.0
    %126 = vmatmul.mubr.f32.gmra.mxu0 %v59
    %v127 = vpop.f32.mrf.mxu0
    %v128 = vadd.f32 %v56, %v127
    %v129 = vpop.f32.mrf.mxu0
    %130 = vdwg.mxu0
    %131 = vst [vmem:[#allocation8] sm:$0xf] %v128
    // Predicated region
    $region26: #{tpu_custom_call.1} parent=1 // pred_check
      _
    $region27: #{tpu_custom_call.1} parent=1 // pred_check_branch
      %133 = sbr.rel (0) target = $region29
    $region28: #{tpu_custom_call.1} parent=1 // pred_region
      %s135 = ssub.s32 64, 64
      %136 = vsyncadd [#allocation4], %s135
      %s138 = sshll.u32 [#allocation8], 4
      %s139 = int_to_ptr.vmem [resolvable:$true] %s138
      %141 = dma.vmem_to_hbm [thread:$0]  %s139, 64, %s3, [#allocation4]
    $region29: #{tpu_custom_call.1} parent=1 // pred_fallthru
      _
    // Predicated region
    $region30: #{tpu_custom_call.1} parent=1 // pred_check
      _
    $region31: #{tpu_custom_call.1} parent=1 // pred_check_branch
      %143 = sbr.rel (0) target = $region33
    $region32: #{tpu_custom_call.1} parent=1 // pred_region
      %144 = dma.done [#allocation4], 64
    $region33: #{tpu_custom_call.1} parent=1 // pred_fallthru
      _
    %145 = vsyncpa [#allocation3], 1
    %146 = vsyncpa [#allocation6], 1
    %147 = vsyncpa [#allocation4], 1

</llo_original>
